<compile_context>
chip_gen: v7x
topology: tpu7x:2x2x1
jax: 0.10.0
libtpu: 0.0.40
codegen_flags: <defaults>
</compile_context>

<pallas_src>
import jax
import jax.numpy as jnp
from jax.experimental import pallas as pl
from jax.experimental.pallas import tpu as pltpu


def _linear1x1_kernel(w_ref, b_ref, x_ref, o_ref):
    # w_ref: (Co, Ci), b_ref: (Co, 1), x_ref: (Ci, THW), o_ref: (Co, THW)
    acc = jnp.dot(w_ref[...], x_ref[...], preferred_element_type=jnp.float32)
    o_ref[...] = (acc + b_ref[...].astype(jnp.float32)).astype(o_ref.dtype)


_TL_CAP = 8192                          # per-step lane cap (steps ~0.35us, already cheap)
_VMEM_TILE_BUDGET = 12 * 1024 * 1024    # budget for double-buffered x/out blocks


def _pick_hw_tile(hw, ci, co, x_itemsize, out_itemsize, n_batch):
    """Lane tile over HW: multiple of 128 (or full HW), VMEM- and pipeline-aware."""
    if hw <= 512:
        # Full-extent block: always a legal BlockSpec, no padding, no OOB.
        return hw
    per_lane = 2 * (ci * x_itemsize + co * out_itemsize)  # 2x double-buffered x + out
    t = min(_TL_CAP, (_VMEM_TILE_BUDGET // per_lane) // 128 * 128)
    t = max(t, 128)
    hw_ceil = -(-hw // 128) * 128
    t = min(t, hw_ceil)
    # Prefer >= ~8 total grid steps (>=4 per TensorCore on v7x) for DMA/compute
    # overlap + megacore sharding, but never drop below 512 lanes (roofline
    # fraction falls off fast below that).
    while t > 512 and n_batch * (-(-hw // t)) < 8:
        t = max(512, (t // 2) // 128 * 128)
    return t


def linear_1x1(x, weight, bias):
    """Pallas implementation of a 1x1 Conv2d with bias.

    x:      [N, Ci, H, W]
    weight: [Co, Ci]   (Conv2d weight squeezed of its 1x1 spatial dims)
    bias:   [Co]
    returns [N, Co, H, W]
    """
    N, Ci, H, W = x.shape
    Co, Ci_w = weight.shape
    assert Ci_w == Ci, "weight input-channel dim must match x channel dim"
    assert bias.shape == (Co,)

    out_dtype = x.dtype
    HW = H * W

    # Free reshapes (NCHW is contiguous over H,W) -- no HBM transpose, no pad.
    x3 = x.reshape(N, Ci, HW)
    b2 = bias.reshape(Co, 1)

    THW = _pick_hw_tile(HW, Ci, Co, x3.dtype.itemsize,
                        jnp.dtype(out_dtype).itemsize, N)
    n_tiles = pl.cdiv(HW, THW)

    grid_spec = pl.GridSpec(
        grid=(N, n_tiles),
        in_specs=[
            pl.BlockSpec((Co, Ci), lambda n, j: (0, 0)),          # weight: resident
            pl.BlockSpec((Co, 1), lambda n, j: (0, 0)),           # bias:   resident
            pl.BlockSpec((None, Ci, THW), lambda n, j: (n, 0, j)),  # x lane tile
        ],
        out_specs=pl.BlockSpec((None, Co, THW), lambda n, j: (n, 0, j)),
    )

    cost = pl.CostEstimate(
        flops=2 * N * HW * Ci * Co,
        transcendentals=0,
        bytes_accessed=(
            x3.size * x3.dtype.itemsize
            + weight.size * weight.dtype.itemsize
            + b2.size * b2.dtype.itemsize
            + N * Co * HW * jnp.dtype(out_dtype).itemsize
        ),
    )

    out3 = pl.pallas_call(
        _linear1x1_kernel,
        out_shape=jax.ShapeDtypeStruct((N, Co, HW), out_dtype),
        grid_spec=grid_spec,
        compiler_params=pltpu.CompilerParams(
            dimension_semantics=("parallel", "parallel"),
            vmem_limit_bytes=32 * 1024 * 1024,
        ),
        cost_estimate=cost,
    )(weight, b2, x3)

    return out3.reshape(N, Co, H, W)


def _linear1x1_ref(x, weight, bias):
    return jnp.einsum("oi,nihw->nohw", weight, x) + bias[None, :, None, None]


if __name__ == "__main__":
    key = jax.random.PRNGKey(0)
    k1, k2, k3, k4, k5 = jax.random.split(key, 5)

    # batch=2, c_in=4, spatial=16, seq=8, c_out(hidden)=32
    N, Ci, H, W, Co = 2, 4, 16, 8, 32

    x = jax.random.normal(k1, (N, Ci, H, W), dtype=jnp.float32)
    weight = jax.random.normal(k2, (Co, Ci), dtype=jnp.float32) * 0.1
    bias = jax.random.normal(k3, (Co,), dtype=jnp.float32) * 0.1

    out = jax.block_until_ready(linear_1x1(x, weight, bias))
    ref = _linear1x1_ref(x, weight, bias)
    assert out.shape == (N, Co, H, W)
    assert jnp.allclose(out, ref, atol=1e-5, rtol=1e-5)

    # Ragged spatial extent (HW < 128 -> full-extent block, no padding).
    x_odd = jax.random.normal(k4, (N, Ci, 10, 7), dtype=jnp.float32)
    out_odd = jax.block_until_ready(linear_1x1(x_odd, weight, bias))
    ref_odd = _linear1x1_ref(x_odd, weight, bias)
    assert out_odd.shape == (N, Co, 10, 7)
    assert jnp.allclose(out_odd, ref_odd, atol=1e-5, rtol=1e-5)

    # Tiled path with a partial final lane tile (HW=640, THW=512 -> OOB-masked tail).
    x_big = jax.random.normal(k5, (N, Ci, 16, 40), dtype=jnp.float32)
    out_big = jax.block_until_ready(linear_1x1(x_big, weight, bias))
    ref_big = _linear1x1_ref(x_big, weight, bias)
    assert out_big.shape == (N, Co, 16, 40)
    assert jnp.allclose(out_big, ref_big, atol=1e-5, rtol=1e-5)

    print("KERNEL_OK")
</pallas_src>

<mosaic_0001>
module attributes {stable_mosaic.version = 11 : i64} {
  func.func @_linear1x1_kernel(%arg0: i32, %arg1: i32, %arg2: memref<32x4xf32, #tpu.memory_space<vmem>>, %arg3: memref<32x1xf32, #tpu.memory_space<vmem>>, %arg4: memref<1x4x128xf32, #tpu.memory_space<vmem>>, %arg5: memref<1x32x128xf32, #tpu.memory_space<vmem>>) attributes {dimension_semantics = [#tpu.dimension_semantics<parallel>, #tpu.dimension_semantics<parallel>], iteration_bounds = array<i64: 2, 1>, scalar_prefetch = 0 : i64, scratch_operands = 0 : i64, tpu.core_type = #tpu.core_type<tc>, window_params = [{pipeline_mode = #tpu.pipeline_mode<synchronous>, transform_indices = @transform_0, window_bounds = array<i64: 32, 4>}, {pipeline_mode = #tpu.pipeline_mode<synchronous>, transform_indices = @transform_1, window_bounds = array<i64: 32, 1>}, {transform_indices = @transform_2, window_bounds = array<i64: 1, 4, 128>}, {transform_indices = @transform_3, window_bounds = array<i64: 1, 32, 128>}]} {
    %c0 = arith.constant 0 : index
    %c0_0 = arith.constant 0 : index
    %0 = vector.load %arg2[%c0, %c0_0] : memref<32x4xf32, #tpu.memory_space<vmem>>, vector<32x4xf32>
    %c0_1 = arith.constant 0 : index
    %c0_2 = arith.constant 0 : index
    %c0_3 = arith.constant 0 : index
    %1 = vector.load %arg4[%c0_1, %c0_2, %c0_3] : memref<1x4x128xf32, #tpu.memory_space<vmem>>, vector<1x4x128xf32>
    %2 = vector.shape_cast %1 : vector<1x4x128xf32> to vector<4x128xf32>
    %cst = arith.constant dense<0.000000e+00> : vector<32x128xf32>
    %3 = tpu.matmul %0, %2, %cst {dimension_numbers = #tpu.dot_dimension_numbers<[1], [0], [0], [1], [0, 0, 1, 1], [], []>} : vector<32x4xf32>, vector<4x128xf32>, vector<32x128xf32> -> vector<32x128xf32>
    %c0_4 = arith.constant 0 : index
    %c0_5 = arith.constant 0 : index
    %4 = vector.load %arg3[%c0_4, %c0_5] : memref<32x1xf32, #tpu.memory_space<vmem>>, vector<32x1xf32>
    %5 = vector.broadcast %4 : vector<32x1xf32> to vector<32x128xf32>
    %6 = arith.addf %3, %5 : vector<32x128xf32>
    %c0_6 = arith.constant 0 : index
    %c0_7 = arith.constant 0 : index
    %c0_8 = arith.constant 0 : index
    %7 = vector.load %arg5[%c0_6, %c0_7, %c0_8] : memref<1x32x128xf32, #tpu.memory_space<vmem>>, vector<1x32x128xf32>
    %8 = vector.shape_cast %7 : vector<1x32x128xf32> to vector<32x128xf32>
    %9 = vector.shape_cast %6 : vector<32x128xf32> to vector<1x32x128xf32>
    tpu.vector_store %arg5[%c0_6, %c0_7, %c0_8], %9 {strides = array<i32>} : memref<1x32x128xf32, #tpu.memory_space<vmem>>, vector<1x32x128xf32>,
    return
  }
  func.func @transform_0(%arg0: i32, %arg1: i32) -> (i32, i32) {
    %c0_i32 = arith.constant 0 : i32
    %c0_i32_0 = arith.constant 0 : i32
    %c0_i32_1 = arith.constant 0 : i32
    return %c0_i32, %c0_i32_0 : i32, i32
  }
  func.func @transform_1(%arg0: i32, %arg1: i32) -> (i32, i32) {
    %c0_i32 = arith.constant 0 : i32
    %c0_i32_0 = arith.constant 0 : i32
    %c0_i32_1 = arith.constant 0 : i32
    return %c0_i32, %c0_i32_0 : i32, i32
  }
  func.func @transform_2(%arg0: i32, %arg1: i32) -> (i32, i32, i32) {
    %c0_i32 = arith.constant 0 : i32
    %c0_i32_0 = arith.constant 0 : i32
    return %arg0, %c0_i32, %arg1 : i32, i32, i32
  }
  func.func @transform_3(%arg0: i32, %arg1: i32) -> (i32, i32, i32) {
    %c0_i32 = arith.constant 0 : i32
    %c0_i32_0 = arith.constant 0 : i32
    return %arg0, %c0_i32, %arg1 : i32, i32, i32
  }
}

</mosaic_0001>

<llo_original>
// kernel: tpu_custom_call.1
$region0: #{tpu_custom_call.1}
  #allocation0 [shape = 'u32[]', space=smem, size = 0x4, offset = 0x4, fixed_abs, tag = 'smem constant byte address 0x4 - core index']
  #allocation1 [shape = 'u32[144,128]{1,0:T(1,128)}', space=vmem, size = 0x12000, scoped, tag = 'internal scratch']
  %s0 = inlined_call_operand.vmem [shape: f32[32,4], index: 0, kind: input, shape index: {}]
  %s1 = inlined_call_operand.vmem [shape: f32[32,1], index: 1, kind: input, shape index: {}]
  %s2 = inlined_call_operand.vmem [shape: f32[2,4,128], index: 2, kind: input, shape index: {}]
  %s3 = inlined_call_operand.hbm [shape: f32[2,32,128], index: 3, kind: output, shape index: {}]
  %s4 = sld [smem:[#allocation0]]
  $region45: #{tpu_custom_call.1} parent=0
    _
  %s6 = ssub.s32 1, %s4
  %s7 = scalar_select 0, %s6, %s4
  $region1: #{tpu_custom_call.1} parent=0
    #allocation2 [shape = 'u8[32768]{0}', space=vmem, size = 0x8000, scoped, tag = 'output window, operand 0']
    #allocation3 [shape = 's32[2]{0}', space=sflag, size = 0x8, scoped, tag = 'scoped memory for tpu_custom_call.1']
    %8 = vsyncpa [#allocation3], 0
    %s9 = scalar_lea.sflag [#allocation3], 1
    %10 = vsyncpa %s9, 0
    loop: start=0, step=1, limit=4
    $region2: #{tpu_custom_call.1} parent=1 // loop_pre_header
      _
    $region3: #{tpu_custom_call.1} parent=1 // loop_header
      %s12 = sphi 0, %s16
      %p13 = scmp.ge.s32.totalorder %s12, 4
      %s19 = sphi 0, %s31
      %s20 = sphi 0, %s27
      %s21 = sphi 0, %s19
      %s22 = sphi 0, %s20
      %s23 = sphi 0, %s21
      %s24 = sphi 0, %s22
      %s32 = sphi 0, %s32
      %s34 = sphi 0, %s32
      %s35 = sphi 0, %s34
      %s49 = sphi 0, %s35
      %s53 = sphi 0, %s53
      %s55 = sphi 0, %s53
      %s56 = sphi 0, %s55
      %s70 = sphi 0, %s56
      %s78 = sphi 0, %s80
      %s81 = sphi 0, %s78
      %s82 = sphi 0, %s81
      %s98 = sphi 0, %s82
      %s106 = sphi 0, %s108
      %s109 = sphi 0, %s106
      %s110 = sphi 0, %s109
      %s126 = sphi 0, %s110
    $region4: #{tpu_custom_call.1} parent=1 // loop_header_branch
      %15 = sbr.rel (%p13) target = $region8
    $region5: #{tpu_custom_call.1} parent=1 // loop_body
      %s17 = ssub.s32 %s12, 1
      %s18 = ssub.s32 %s12, 2
      %s25 = sadd.s32 1, %s20
      %p26 = scmp.ge.s32.totalorder %s25, 1
      %s27 = scalar_select %p26, 0, %s25
      %s28 = sadd.s32 1, %s19
      %s29 = scalar_select %p26, %s28, %s19
      %p30 = scmp.ge.s32.totalorder %s29, 2
      %s31 = scalar_select %p30, 0, %s29
      %s33 = sadd.s32 %s32, 1
      %p36 = scmp.eq.s32.totalorder %s12, 1
      %p37 = scmp.ne.s32.totalorder %s32, %s34
      %p38 = scmp.eq.s32.totalorder %s12, 0
      %p39 = por %p37, %p38
      %p40 = scmp.ne.s32.totalorder %s32, %s34
      %p41 = scmp.eq.s32.totalorder %s17, 1
      %p42 = por %p40, %p41
      %p43 = scmp.ne.s32.totalorder %s34, %s35
      %p44 = scmp.eq.s32.totalorder %s17, 0
      %p45 = por %p43, %p44
      %p46 = scmp.ne.s32.totalorder %s34, %s35
      %p47 = scmp.eq.s32.totalorder %s18, 1
      %p48 = por %p46, %p47
      %p50 = scmp.ne.s32.totalorder %s35, %s49
      %p51 = scmp.eq.s32.totalorder %s18, 0
      %p52 = por %p50, %p51
      %s54 = sadd.s32 %s53, 1
      %p57 = scmp.eq.s32.totalorder %s12, 1
      %p58 = scmp.ne.s32.totalorder %s53, %s55
      %p59 = scmp.eq.s32.totalorder %s12, 0
      %p60 = por %p58, %p59
      %p61 = scmp.ne.s32.totalorder %s53, %s55
      %p62 = scmp.eq.s32.totalorder %s17, 1
      %p63 = por %p61, %p62
      %p64 = scmp.ne.s32.totalorder %s55, %s56
      %p65 = scmp.eq.s32.totalorder %s17, 0
      %p66 = por %p64, %p65
      %p67 = scmp.ne.s32.totalorder %s55, %s56
      %p68 = scmp.eq.s32.totalorder %s18, 1
      %p69 = por %p67, %p68
      %p71 = scmp.ne.s32.totalorder %s56, %s70
      %p72 = scmp.eq.s32.totalorder %s18, 0
      %p73 = por %p71, %p72
      %s74 = ssub.s32 %s19, %s31
      %s75 = ssub.s32 %s20, %s27
      %s76 = sor.u32 %s74, %s75
      %p77 = scmp.eq.s32.totalorder %s76, 0
      %s79 = sadd.s32 %s78, 1
      %s80 = scalar_select %p77, %s78, %s79
      %p83 = pneg %p77
      %p84 = scmp.eq.s32.totalorder %s12, 1
      %p85 = por %p83, %p84
      %p86 = scmp.ne.s32.totalorder %s78, %s81
      %p87 = scmp.eq.s32.totalorder %s12, 0
      %p88 = por %p86, %p87
      %p89 = scmp.ne.s32.totalorder %s78, %s81
      %p90 = scmp.eq.s32.totalorder %s17, 1
      %p91 = por %p89, %p90
      %p92 = scmp.ne.s32.totalorder %s81, %s82
      %p93 = scmp.eq.s32.totalorder %s17, 0
      %p94 = por %p92, %p93
      %p95 = scmp.ne.s32.totalorder %s81, %s82
      %p96 = scmp.eq.s32.totalorder %s18, 1
      %p97 = por %p95, %p96
      %p99 = scmp.ne.s32.totalorder %s82, %s98
      %p100 = scmp.eq.s32.totalorder %s18, 0
      %p101 = por %p99, %p100
      %s102 = ssub.s32 %s19, %s31
      %s103 = ssub.s32 %s20, %s27
      %s104 = sor.u32 %s102, %s103
      %p105 = scmp.eq.s32.totalorder %s104, 0
      %s107 = sadd.s32 %s106, 1
      %s108 = scalar_select %p105, %s106, %s107
      %p111 = pneg %p105
      %p112 = scmp.eq.s32.totalorder %s12, 1
      %p113 = por %p111, %p112
      %p114 = scmp.ne.s32.totalorder %s106, %s109
      %p115 = scmp.eq.s32.totalorder %s12, 0
      %p116 = por %p114, %p115
      %p117 = scmp.ne.s32.totalorder %s106, %s109
      %p118 = scmp.eq.s32.totalorder %s17, 1
      %p119 = por %p117, %p118
      %p120 = scmp.ne.s32.totalorder %s109, %s110
      %p121 = scmp.eq.s32.totalorder %s17, 0
      %p122 = por %p120, %p121
      %p123 = scmp.ne.s32.totalorder %s109, %s110
      %p124 = scmp.eq.s32.totalorder %s18, 1
      %p125 = por %p123, %p124
      %p127 = scmp.ne.s32.totalorder %s110, %s126
      %p128 = scmp.eq.s32.totalorder %s18, 0
      %p129 = por %p127, %p128
      %p130 = scmp.le.s32.totalorder 1, %s12
      %p131 = scmp.lt.s32.totalorder %s12, 3
      %p132 = pnand %p130, %p131
      %p133 = pneg %p132
      // Predicated region
      $region9: #{tpu_custom_call.1} parent=5 // pred_check
        _
      $region10: #{tpu_custom_call.1} parent=5 // pred_check_branch
        %135 = sbr.rel (%p132) target = $region12
      $region11: #{tpu_custom_call.1} parent=5 // pred_region
        %s136 = ssub.s32 %s12, 1
        // Predicated region
        $region13: #{tpu_custom_call.1} parent=11 // pred_check
          %p137 = pneg %p45
        $region14: #{tpu_custom_call.1} parent=11 // pred_check_branch
          %139 = sbr.rel (%p137) target = $region16
        $region15: #{tpu_custom_call.1} parent=11 // pred_region
          _
        $region16: #{tpu_custom_call.1} parent=11 // pred_fallthru
          _
        // Predicated region
        $region17: #{tpu_custom_call.1} parent=11 // pred_check
          %p140 = pneg %p66
        $region18: #{tpu_custom_call.1} parent=11 // pred_check_branch
          %142 = sbr.rel (%p140) target = $region20
        $region19: #{tpu_custom_call.1} parent=11 // pred_region
          _
        $region20: #{tpu_custom_call.1} parent=11 // pred_fallthru
          _
      $region12: #{tpu_custom_call.1} parent=5 // pred_fallthru
        _
      %p143 = scmp.lt.s32.totalorder %s12, 2
      // Predicated region
      $region21: #{tpu_custom_call.1} parent=5 // pred_check
        %p144 = pneg %p143
      $region22: #{tpu_custom_call.1} parent=5 // pred_check_branch
        %146 = sbr.rel (%p144) target = $region24
      $region23: #{tpu_custom_call.1} parent=5 // pred_region
        // Predicated region
        $region25: #{tpu_custom_call.1} parent=23 // pred_check
          %p147 = pneg %p88
        $region26: #{tpu_custom_call.1} parent=23 // pred_check_branch
          %149 = sbr.rel (%p147) target = $region28
        $region27: #{tpu_custom_call.1} parent=23 // pred_region
          %p150 = scmp.lt.s32.totalorder %s19, 1
          %s151 = scalar_select %p150, %s19, 1
          %p152 = scmp.lt.s32.totalorder %s20, 0
          %s153 = scalar_select %p152, %s20, 0
          %s154 = sadd.s32 %s153, %s151
          %s155 = smul.addr %s154, 4
          %s156 = scalar_lea.vmem %s2, %s155
        $region28: #{tpu_custom_call.1} parent=23 // pred_fallthru
          _
      $region24: #{tpu_custom_call.1} parent=5 // pred_fallthru
        _
      %p157 = scmp.le.s32.totalorder 1, %s12
      %p158 = scmp.lt.s32.totalorder %s12, 3
      %p159 = pnand %p157, %p158
      %p160 = pneg %p159
      // Predicated region
      $region29: #{tpu_custom_call.1} parent=5 // pred_check
        _
      $region30: #{tpu_custom_call.1} parent=5 // pred_check_branch
        %162 = sbr.rel (%p159) target = $region32
      $region31: #{tpu_custom_call.1} parent=5 // pred_region
        %s163 = ssub.s32 %s12, 1
        %p164 = pneg %p45
        %p165 = pneg %p42
        %p166 = pneg %p66
        %p167 = pneg %p63
        %p168 = scmp.lt.s32.totalorder %s21, 1
        %s169 = scalar_select %p168, %s21, 1
        %p170 = scmp.lt.s32.totalorder %s22, 0
        %s171 = scalar_select %p170, %s22, 0
        %s172 = sadd.s32 %s171, %s169
        %s173 = smul.addr %s172, 4
        %s174 = scalar_lea.vmem %s2, %s173
        %p175 = pneg %p94
        %p176 = pneg %p91
        %p177 = pneg %p122
        %p178 = pneg %p119
        %s179 = sand.u32 %s109, 1
        %s180 = scalar_lea.sflag [#allocation3], %s179
        %s181 = sand.u32 %s109, 1
        %s182 = smul.addr %s181, 32
        %s183 = scalar_lea.vmem [#allocation2], %s182
        %p184 = scmp.lt.s32.totalorder %s21, 1
        %s185 = scalar_select %p184, %s21, 1
        %p186 = scmp.lt.s32.totalorder %s22, 0
        %s187 = scalar_select %p186, %s22, 0
        %s188 = sadd.s32 %s187, %s185
        %s189 = smul.addr %s188, 4
        %s190 = scalar_lea.vmem %s2, %s189
        %v191 = vld [vmem:[%s0] sm:$0xff]
        %v192 = vld [vmem:[%s0 + $0x8] sm:$0xff]
        %v193 = vld [vmem:[%s0 + $0x10] sm:$0xff]
        %v194 = vld [vmem:[%s0 + $0x18] sm:$0xff]
        %v195 = vld [vmem:[%s190] sm:$0xf]
        %v196 = vld [vmem:[%s1] sm:$0xff]
        %v197 = vld [vmem:[%s1 + $0x8] sm:$0xff]
        %v198 = vld [vmem:[%s1 + $0x10] sm:$0xff]
        %v199 = vld [vmem:[%s1 + $0x18] sm:$0xff]
        %201 = vset.pattern.permute.xlu0 0
        %202 = vperm.xlu0 %201, %v196
        %v203 = vpop.permute.xlu0 %202
        %206 = vset.pattern.permute.xlu0 0
        %207 = vperm.xlu0 %206, %v197
        %v208 = vpop.permute.xlu0 %207
        %211 = vset.pattern.permute.xlu0 0
        %212 = vperm.xlu0 %211, %v198
        %v213 = vpop.permute.xlu0 %212
        %216 = vset.pattern.permute.xlu0 0
        %217 = vperm.xlu0 %216, %v199
        %v218 = vpop.permute.xlu0 %217
        %vm220 = vcmask 31744
        %v222 = vsel %vm220, %v191, 0
        %v225 = vsel %vm220, %v192, 0
        %v228 = vsel %vm220, %v193, 0
        %v231 = vsel %vm220, %v194, 0
        %vm233 = vcmask 1043456
        %v235 = vsel %vm233, %v195, 0
        %237 = vmatprep.subr.mxu0 0.0
        %238 = vmatpush1.msra.mxu0 %v235
        %239 = vmatprep.subr.mxu0 0.0
        %240 = vmatpush1.msra.mxu0 0.0
        %241 = vmatprep.subr.mxu0 0.0
        %242 = vmatpush1.msra.mxu0 0.0
        %243 = vmatprep.subr.mxu0 0.0
        %244 = vmatpush1.msra.mxu0 0.0
        %245 = vmatprep.subr.mxu0 0.0
        %246 = vmatpush1.msra.mxu0 0.0
        %247 = vmatprep.subr.mxu0 0.0
        %248 = vmatpush1.msra.mxu0 0.0
        %249 = vmatprep.subr.mxu0 0.0
        %250 = vmatpush1.msra.mxu0 0.0
        %251 = vmatprep.subr.mxu0 0.0
        %252 = vmatpush1.msra.mxu0 0.0
        %253 = vmatprep.subr.mxu0 0.0
        %254 = vmatpush1.msra.mxu0 0.0
        %255 = vmatprep.subr.mxu0 0.0
        %256 = vmatpush1.msra.mxu0 0.0
        %257 = vmatprep.subr.mxu0 0.0
        %258 = vmatpush1.msra.mxu0 0.0
        %259 = vmatprep.subr.mxu0 0.0
        %260 = vmatpush1.msra.mxu0 0.0
        %261 = vmatprep.subr.mxu0 0.0
        %262 = vmatpush1.msra.mxu0 0.0
        %263 = vmatprep.subr.mxu0 0.0
        %264 = vmatpush1.msra.mxu0 0.0
        %265 = vmatprep.subr.mxu0 0.0
        %266 = vmatpush1.msra.mxu0 0.0
        %267 = vmatprep.subr.mxu0 0.0
        %268 = vmatpush1.msra.mxu0 0.0
        %269 = vmatprep.subr.mxu0 0.0
        %270 = vmatpush1.msra.mxu0 0.0
        %271 = vmatprep.subr.mxu0 0.0
        %272 = vmatpush1.msra.mxu0 0.0
        %273 = vmatprep.subr.mxu0 0.0
        %274 = vmatpush1.msra.mxu0 0.0
        %275 = vmatprep.subr.mxu0 0.0
        %276 = vmatpush1.msra.mxu0 0.0
        %277 = vmatprep.subr.mxu0 0.0
        %278 = vmatpush1.msra.mxu0 0.0
        %279 = vmatprep.subr.mxu0 0.0
        %280 = vmatpush1.msra.mxu0 0.0
        %281 = vmatprep.subr.mxu0 0.0
        %282 = vmatpush1.msra.mxu0 0.0
        %283 = vmatprep.subr.mxu0 0.0
        %284 = vmatpush1.msra.mxu0 0.0
        %285 = vmatprep.subr.mxu0 0.0
        %286 = vmatpush1.msra.mxu0 0.0
        %287 = vmatprep.subr.mxu0 0.0
        %288 = vmatpush1.msra.mxu0 0.0
        %289 = vmatprep.subr.mxu0 0.0
        %290 = vmatpush1.msra.mxu0 0.0
        %291 = vmatprep.subr.mxu0 0.0
        %292 = vmatpush1.msra.mxu0 0.0
        %293 = vmatprep.subr.mxu0 0.0
        %294 = vmatpush1.msra.mxu0 0.0
        %295 = vmatprep.subr.mxu0 0.0
        %296 = vmatpush1.msra.mxu0 0.0
        %297 = vmatprep.subr.mxu0 0.0
        %298 = vmatpush1.msra.mxu0 0.0
        %299 = vmatprep.subr.mxu0 0.0
        %300 = vmatpush1.msra.mxu0 0.0
        %301 = vmatprep.mubr.f32.mxu0 0.0
        %302 = vmatmul.mubr.f32.gmra.mrb[0].mxu0 %v222
        %v303 = vpop.f32.mrb[0].mxu0
        %v304 = vadd.f32 %v203, %v303
        %v305 = vpop.f32.mrb[0].mxu0
        %306 = vmatprep.mubr.f32.mxu0 0.0
        %307 = vmatmul.mubr.f32.gmra.mrb[0].mxu0 %v225
        %v308 = vpop.f32.mrb[0].mxu0
        %v309 = vadd.f32 %v208, %v308
        %v310 = vpop.f32.mrb[0].mxu0
        %311 = vmatprep.mubr.f32.mxu0 0.0
        %312 = vmatmul.mubr.f32.gmra.mrb[0].mxu0 %v228
        %v313 = vpop.f32.mrb[0].mxu0
        %v314 = vadd.f32 %v213, %v313
        %v315 = vpop.f32.mrb[0].mxu0
        %316 = vmatprep.mubr.f32.mxu0 0.0
        %317 = vmatmul.mubr.f32.gmra.mrb[0].mxu0 %v231
        %v318 = vpop.f32.mrb[0].mxu0
        %v319 = vadd.f32 %v218, %v318
        %v320 = vpop.f32.mrb[0].mxu0
        %321 = vdwg.mxu0
        %322 = vst [vmem:[%s183] sm:$0xff] %v304
        %323 = vst [vmem:[%s183 + $0x8] sm:$0xff] %v309
        %324 = vst [vmem:[%s183 + $0x10] sm:$0xff] %v314
        %325 = vst [vmem:[%s183 + $0x18] sm:$0xff] %v319
        %s326 = sand.u32 %s109, 1
        %s327 = scalar_lea.sflag [#allocation3], %s326
        %s328 = sand.u32 %s109, 1
        %s329 = smul.addr %s328, 32
        %s330 = scalar_lea.vmem [#allocation2], %s329
        // Predicated region
        $region33: #{tpu_custom_call.1} parent=31 // pred_check
          %p331 = pneg %p119
        $region34: #{tpu_custom_call.1} parent=31 // pred_check_branch
          %333 = sbr.rel (%p331) target = $region36
        $region35: #{tpu_custom_call.1} parent=31 // pred_region
          %s335 = ssub.s32 512, 512
          %336 = vsyncadd %s327, %s335
          %s337 = smul.addr %s21, 4
          %s338 = sadd.s32 %s22, %s337
          %s339 = smul.addr %s338, 128
          %s340 = scalar_lea.hbm %s3, %s339
          %s341 = sshll.u32 %s330, 4
          %s342 = int_to_ptr.vmem [resolvable:$true] %s341
          %347 = dma.vmem_to_hbm [thread:$0]  %s342, 512, %s340, %s327, 128, 128, 8
        $region36: #{tpu_custom_call.1} parent=31 // pred_fallthru
          _
      $region32: #{tpu_custom_call.1} parent=5 // pred_fallthru
        _
      %p348 = scmp.le.s32.totalorder 2, %s12
      // Predicated region
      $region37: #{tpu_custom_call.1} parent=5 // pred_check
        %p349 = pneg %p348
      $region38: #{tpu_custom_call.1} parent=5 // pred_check_branch
        %351 = sbr.rel (%p349) target = $region40
      $region39: #{tpu_custom_call.1} parent=5 // pred_region
        %s352 = ssub.s32 %s12, 2
        // Predicated region
        $region41: #{tpu_custom_call.1} parent=39 // pred_check
          %p353 = pneg %p125
        $region42: #{tpu_custom_call.1} parent=39 // pred_check_branch
          %355 = sbr.rel (%p353) target = $region44
        $region43: #{tpu_custom_call.1} parent=39 // pred_region
          %s356 = sand.u32 %s110, 1
          %s357 = scalar_lea.sflag [#allocation3], %s356
          %s358 = sand.u32 %s110, 1
          %s359 = smul.addr %s358, 32
          %s360 = scalar_lea.vmem [#allocation2], %s359
          %361 = dma.done %s357, 512
        $region44: #{tpu_custom_call.1} parent=39 // pred_fallthru
          _
      $region40: #{tpu_custom_call.1} parent=5 // pred_fallthru
        _
    $region6: #{tpu_custom_call.1} parent=1 // loop_footer
      %s16 = sadd.s32 1, %s12
    $region7: #{tpu_custom_call.1} parent=1 // loop_footer_branch
      %11 = sbr.rel target = $region3
    $region8: #{tpu_custom_call.1} parent=1 // loop_exit
      _
    %362 = vsyncpa [#allocation3], 1
    %s363 = scalar_lea.sflag [#allocation3], 1
    %364 = vsyncpa %s363, 1

</llo_original>
